<compile_context>
chip_gen: v5e
topology: v5e:2x2
jax: 0.10.0
libtpu: 0.0.40
codegen_flags: <defaults>
</compile_context>

<pallas_src>
import numpy as np
import jax
import jax.numpy as jnp
from jax.experimental import pallas as pl
from jax.experimental.pallas import tpu as pltpu


# ----------------------------- schedule ------------------------------------
def cosine_beta_schedule(timesteps, s=0.008):
    steps = timesteps + 1
    x = np.linspace(0, steps, steps)
    alphas_cumprod = np.cos((x / steps + s) / (1 + s) * np.pi * 0.5) ** 2
    alphas_cumprod = alphas_cumprod / alphas_cumprod[0]
    betas = 1 - alphas_cumprod[1:] / alphas_cumprod[:-1]
    return np.clip(betas, a_min=0, a_max=0.999)


def make_diffusion_params(timesteps, channels, classes):
    betas = cosine_beta_schedule(timesteps)
    alphas = 1.0 - betas
    alphas_cumprod = np.cumprod(alphas, axis=0)

    # deterministic synthetic denoiser parameters
    kw, kb, kt, kc = jax.random.split(jax.random.PRNGKey(42), 4)
    w = jax.random.normal(kw, (channels, channels), dtype=jnp.float32) * 0.1
    b = jax.random.normal(kb, (channels,), dtype=jnp.float32) * 0.01
    time_emb = jax.random.normal(kt, (timesteps, channels), dtype=jnp.float32) * 0.1
    class_emb = jax.random.normal(kc, (classes, channels), dtype=jnp.float32) * 0.1

    return dict(
        num_timesteps=timesteps,
        sqrt_alphas_cumprod=jnp.asarray(np.sqrt(alphas_cumprod), jnp.float32),
        sqrt_one_minus_alphas_cumprod=jnp.asarray(
            np.sqrt(1.0 - alphas_cumprod), jnp.float32
        ),
        w=w,
        b=b,
        time_emb=time_emb,
        class_emb=class_emb,
    )


# ------------------------------ kernel --------------------------------------
def diffusion_loss_kernel(
    coef_ref,  # SMEM (B, 2)   -- [sqrt_ac[t_b], sqrt_1m_ac[t_b]] per batch
    w_ref,     # SMEM (C, C)   -- 1x1-conv weight
    eb_ref,    # SMEM (B, C)   -- (time_emb[t_b] + class_emb[l_b]) @ W + bias
    x_ref,     # VMEM (1, C, HW) -- x_start, lane-dense (H*W on lanes)
    n_ref,     # VMEM (1, C, HW) -- gaussian noise, lane-dense
    out_ref,   # VMEM (1, 1, 1)  -- per-batch sum of |noise - x_recon|
):
    b = pl.program_id(0)
    C = x_ref.shape[1]

    sa = coef_ref[b, 0]
    somc = coef_ref[b, 1]

    x = x_ref[0]   # (C, HW)
    n = n_ref[0]   # (C, HW)

    # q_sample (VPU, lane-dense)
    x_noisy = sa * x + somc * n  # (C, HW)

    # synthetic denoise_fn as an unrolled VPU channel mix (no MXU for C=4):
    #   recon[co, :] = sum_ci W[ci, co] * x_noisy[ci, :] + eff_bias[b, co]
    # where eff_bias = (t_emb + c_emb) @ W + bias (folded in the wrapper).
    abs_acc = None
    for co in range(C):
        r = x_noisy[0:1, :] * w_ref[0, co]
        for ci in range(1, C):
            r = r + x_noisy[ci:ci + 1, :] * w_ref[ci, co]
        r = r + eb_ref[b, co]
        d = jnp.abs(n[co:co + 1, :] - r)  # (1, HW)
        abs_acc = d if abs_acc is None else abs_acc + d

    out_ref[...] = jnp.sum(abs_acc).reshape(1, 1, 1)


# ------------------------------ wrapper --------------------------------------
def gaussian_diffusion_forward(x_nchw, labels, key, params):
    """Returns (kernel_loss, pure_jax_reference_loss) for the l1 training loss."""
    B, C, H, W = x_nchw.shape
    HW = H * W

    # lane-dense layout: (B, C, H*W) -- H*W sits on the 128-lane axis.
    x = x_nchw.reshape(B, C, HW).astype(jnp.float32)

    k_t, k_noise = jax.random.split(key)
    t = jax.random.randint(k_t, (B,), 0, params["num_timesteps"])
    noise = jax.random.normal(k_noise, (B, C, HW), dtype=jnp.float32)

    sa = params["sqrt_alphas_cumprod"][t]                    # (B,)
    somc = params["sqrt_one_minus_alphas_cumprod"][t]        # (B,)
    coefs = jnp.stack([sa, somc], axis=-1)                   # (B, 2)

    emb = params["time_emb"][t] + params["class_emb"][labels]          # (B, C)
    eff_bias = emb @ params["w"] + params["b"]                          # (B, C)
    w = params["w"]                                                     # (C, C)

    smem_spec = pl.BlockSpec(memory_space=pltpu.MemorySpace.SMEM)

    per_batch_abs_sum = pl.pallas_call(
        diffusion_loss_kernel,
        out_shape=jax.ShapeDtypeStruct((B, 1, 1), jnp.float32),
        grid_spec=pltpu.PrefetchScalarGridSpec(
            num_scalar_prefetch=0,
            grid=(B,),
            in_specs=[
                smem_spec,                                        # coefs
                smem_spec,                                        # W
                smem_spec,                                        # eff_bias
                pl.BlockSpec((1, C, HW), lambda b: (b, 0, 0)),    # x
                pl.BlockSpec((1, C, HW), lambda b: (b, 0, 0)),    # noise
            ],
            out_specs=pl.BlockSpec((1, 1, 1), lambda b: (b, 0, 0)),
        ),
        compiler_params=pltpu.CompilerParams(
            dimension_semantics=("parallel",),
        ),
    )(coefs, w, eff_bias, x, noise)

    # mean over all elements (B*C*H*W), matching (noise - x_recon).abs().mean()
    loss = jnp.sum(per_batch_abs_sum) / (B * C * HW)

    # pure-JAX reference (same t / noise / layout) for verification
    x_noisy_ref = sa[:, None, None] * x + somc[:, None, None] * noise   # (B,C,HW)
    h_ref = x_noisy_ref + emb[:, :, None]
    recon_ref = jnp.einsum("bch,cd->bdh", h_ref, w) + params["b"][None, :, None]
    loss_ref = jnp.mean(jnp.abs(noise - recon_ref))
    return loss, loss_ref


# ------------------------------ main -----------------------------------------
if __name__ == "__main__":
    B, C, H, W = 2, 4, 16, 16
    TIMESTEPS, CLASSES = 100, 10

    params = make_diffusion_params(TIMESTEPS, C, CLASSES)

    key = jax.random.PRNGKey(0)
    kx, kl, kfwd = jax.random.split(key, 3)
    x = jax.random.normal(kx, (B, C, H, W), dtype=jnp.float32)  # NCHW like PyTorch
    labels = jax.random.randint(kl, (B,), 0, CLASSES)

    loss, loss_ref = gaussian_diffusion_forward(x, labels, kfwd, params)
    loss = jax.block_until_ready(loss)
    loss_ref = jax.block_until_ready(loss_ref)

    assert jnp.isfinite(loss), "loss is not finite"
    np.testing.assert_allclose(np.asarray(loss), np.asarray(loss_ref),
                               rtol=1e-4, atol=1e-5)

    # TODO(synk): denoise_fn is an injected module in the PyTorch code; a
    # deterministic synthetic 1x1-conv + time/class-embedding denoiser is used.
    print("KERNEL_OK")
</pallas_src>

<mosaic_0001>
module attributes {stable_mosaic.version = 11 : i64} {
  func.func @diffusion_loss_kernel(%arg0: i32, %arg1: memref<2x2xf32, #tpu.memory_space<smem>>, %arg2: memref<4x4xf32, #tpu.memory_space<smem>>, %arg3: memref<2x4xf32, #tpu.memory_space<smem>>, %arg4: memref<1x4x256xf32, #tpu.memory_space<vmem>>, %arg5: memref<1x4x256xf32, #tpu.memory_space<vmem>>, %arg6: memref<1x1x1xf32, #tpu.memory_space<vmem>>) attributes {dimension_semantics = [#tpu.dimension_semantics<parallel>], iteration_bounds = array<i64: 2>, scalar_prefetch = 0 : i64, scratch_operands = 0 : i64, tpu.core_type = #tpu.core_type<tc>, window_params = [{transform_indices = @transform_0, window_bounds = array<i64: 2, 2>}, {transform_indices = @transform_1, window_bounds = array<i64: 4, 4>}, {transform_indices = @transform_2, window_bounds = array<i64: 2, 4>}, {transform_indices = @transform_3, window_bounds = array<i64: 1, 4, 256>}, {transform_indices = @transform_4, window_bounds = array<i64: 1, 4, 256>}, {transform_indices = @transform_5, window_bounds = array<i64: 1, 1, 1>}]} {
    %0 = arith.index_cast %arg0 : i32 to index
    %c0 = arith.constant 0 : index
    %1 = memref.load %arg1[%0, %c0] : memref<2x2xf32, #tpu.memory_space<smem>>
    %2 = arith.index_cast %arg0 : i32 to index
    %c1 = arith.constant 1 : index
    %3 = memref.load %arg1[%2, %c1] : memref<2x2xf32, #tpu.memory_space<smem>>
    %c0_0 = arith.constant 0 : index
    %c0_1 = arith.constant 0 : index
    %c0_2 = arith.constant 0 : index
    %4 = vector.load %arg4[%c0_0, %c0_1, %c0_2] : memref<1x4x256xf32, #tpu.memory_space<vmem>>, vector<1x4x256xf32>
    %5 = vector.shape_cast %4 : vector<1x4x256xf32> to vector<4x256xf32>
    %c0_3 = arith.constant 0 : index
    %c0_4 = arith.constant 0 : index
    %c0_5 = arith.constant 0 : index
    %6 = vector.load %arg5[%c0_3, %c0_4, %c0_5] : memref<1x4x256xf32, #tpu.memory_space<vmem>>, vector<1x4x256xf32>
    %7 = vector.shape_cast %6 : vector<1x4x256xf32> to vector<4x256xf32>
    %8 = vector.broadcast %1 : f32 to vector<4x256xf32>
    %9 = arith.mulf %8, %5 : vector<4x256xf32>
    %10 = vector.broadcast %3 : f32 to vector<4x256xf32>
    %11 = arith.mulf %10, %7 : vector<4x256xf32>
    %12 = arith.addf %9, %11 : vector<4x256xf32>
    %13 = vector.extract_strided_slice %12 {offsets = [0, 0], sizes = [1, 256], strides = [1, 1]} : vector<4x256xf32> to vector<1x256xf32>
    %c0_6 = arith.constant 0 : index
    %c0_7 = arith.constant 0 : index
    %14 = memref.load %arg2[%c0_6, %c0_7] : memref<4x4xf32, #tpu.memory_space<smem>>
    %15 = vector.broadcast %14 : f32 to vector<1x256xf32>
    %16 = arith.mulf %13, %15 : vector<1x256xf32>
    %17 = vector.extract_strided_slice %12 {offsets = [1, 0], sizes = [1, 256], strides = [1, 1]} : vector<4x256xf32> to vector<1x256xf32>
    %c1_8 = arith.constant 1 : index
    %c0_9 = arith.constant 0 : index
    %18 = memref.load %arg2[%c1_8, %c0_9] : memref<4x4xf32, #tpu.memory_space<smem>>
    %19 = vector.broadcast %18 : f32 to vector<1x256xf32>
    %20 = arith.mulf %17, %19 : vector<1x256xf32>
    %21 = arith.addf %16, %20 : vector<1x256xf32>
    %22 = vector.extract_strided_slice %12 {offsets = [2, 0], sizes = [1, 256], strides = [1, 1]} : vector<4x256xf32> to vector<1x256xf32>
    %c2 = arith.constant 2 : index
    %c0_10 = arith.constant 0 : index
    %23 = memref.load %arg2[%c2, %c0_10] : memref<4x4xf32, #tpu.memory_space<smem>>
    %24 = vector.broadcast %23 : f32 to vector<1x256xf32>
    %25 = arith.mulf %22, %24 : vector<1x256xf32>
    %26 = arith.addf %21, %25 : vector<1x256xf32>
    %27 = vector.extract_strided_slice %12 {offsets = [3, 0], sizes = [1, 256], strides = [1, 1]} : vector<4x256xf32> to vector<1x256xf32>
    %c3 = arith.constant 3 : index
    %c0_11 = arith.constant 0 : index
    %28 = memref.load %arg2[%c3, %c0_11] : memref<4x4xf32, #tpu.memory_space<smem>>
    %29 = vector.broadcast %28 : f32 to vector<1x256xf32>
    %30 = arith.mulf %27, %29 : vector<1x256xf32>
    %31 = arith.addf %26, %30 : vector<1x256xf32>
    %32 = arith.index_cast %arg0 : i32 to index
    %c0_12 = arith.constant 0 : index
    %33 = memref.load %arg3[%32, %c0_12] : memref<2x4xf32, #tpu.memory_space<smem>>
    %34 = vector.broadcast %33 : f32 to vector<1x256xf32>
    %35 = arith.addf %31, %34 : vector<1x256xf32>
    %36 = vector.extract_strided_slice %7 {offsets = [0, 0], sizes = [1, 256], strides = [1, 1]} : vector<4x256xf32> to vector<1x256xf32>
    %37 = arith.subf %36, %35 : vector<1x256xf32>
    %38 = math.absf %37 : vector<1x256xf32>
    %39 = vector.extract_strided_slice %12 {offsets = [0, 0], sizes = [1, 256], strides = [1, 1]} : vector<4x256xf32> to vector<1x256xf32>
    %c0_13 = arith.constant 0 : index
    %c1_14 = arith.constant 1 : index
    %40 = memref.load %arg2[%c0_13, %c1_14] : memref<4x4xf32, #tpu.memory_space<smem>>
    %41 = vector.broadcast %40 : f32 to vector<1x256xf32>
    %42 = arith.mulf %39, %41 : vector<1x256xf32>
    %43 = vector.extract_strided_slice %12 {offsets = [1, 0], sizes = [1, 256], strides = [1, 1]} : vector<4x256xf32> to vector<1x256xf32>
    %c1_15 = arith.constant 1 : index
    %c1_16 = arith.constant 1 : index
    %44 = memref.load %arg2[%c1_15, %c1_16] : memref<4x4xf32, #tpu.memory_space<smem>>
    %45 = vector.broadcast %44 : f32 to vector<1x256xf32>
    %46 = arith.mulf %43, %45 : vector<1x256xf32>
    %47 = arith.addf %42, %46 : vector<1x256xf32>
    %48 = vector.extract_strided_slice %12 {offsets = [2, 0], sizes = [1, 256], strides = [1, 1]} : vector<4x256xf32> to vector<1x256xf32>
    %c2_17 = arith.constant 2 : index
    %c1_18 = arith.constant 1 : index
    %49 = memref.load %arg2[%c2_17, %c1_18] : memref<4x4xf32, #tpu.memory_space<smem>>
    %50 = vector.broadcast %49 : f32 to vector<1x256xf32>
    %51 = arith.mulf %48, %50 : vector<1x256xf32>
    %52 = arith.addf %47, %51 : vector<1x256xf32>
    %53 = vector.extract_strided_slice %12 {offsets = [3, 0], sizes = [1, 256], strides = [1, 1]} : vector<4x256xf32> to vector<1x256xf32>
    %c3_19 = arith.constant 3 : index
    %c1_20 = arith.constant 1 : index
    %54 = memref.load %arg2[%c3_19, %c1_20] : memref<4x4xf32, #tpu.memory_space<smem>>
    %55 = vector.broadcast %54 : f32 to vector<1x256xf32>
    %56 = arith.mulf %53, %55 : vector<1x256xf32>
    %57 = arith.addf %52, %56 : vector<1x256xf32>
    %58 = arith.index_cast %arg0 : i32 to index
    %c1_21 = arith.constant 1 : index
    %59 = memref.load %arg3[%58, %c1_21] : memref<2x4xf32, #tpu.memory_space<smem>>
    %60 = vector.broadcast %59 : f32 to vector<1x256xf32>
    %61 = arith.addf %57, %60 : vector<1x256xf32>
    %62 = vector.extract_strided_slice %7 {offsets = [1, 0], sizes = [1, 256], strides = [1, 1]} : vector<4x256xf32> to vector<1x256xf32>
    %63 = arith.subf %62, %61 : vector<1x256xf32>
    %64 = math.absf %63 : vector<1x256xf32>
    %65 = arith.addf %38, %64 : vector<1x256xf32>
    %66 = vector.extract_strided_slice %12 {offsets = [0, 0], sizes = [1, 256], strides = [1, 1]} : vector<4x256xf32> to vector<1x256xf32>
    %c0_22 = arith.constant 0 : index
    %c2_23 = arith.constant 2 : index
    %67 = memref.load %arg2[%c0_22, %c2_23] : memref<4x4xf32, #tpu.memory_space<smem>>
    %68 = vector.broadcast %67 : f32 to vector<1x256xf32>
    %69 = arith.mulf %66, %68 : vector<1x256xf32>
    %70 = vector.extract_strided_slice %12 {offsets = [1, 0], sizes = [1, 256], strides = [1, 1]} : vector<4x256xf32> to vector<1x256xf32>
    %c1_24 = arith.constant 1 : index
    %c2_25 = arith.constant 2 : index
    %71 = memref.load %arg2[%c1_24, %c2_25] : memref<4x4xf32, #tpu.memory_space<smem>>
    %72 = vector.broadcast %71 : f32 to vector<1x256xf32>
    %73 = arith.mulf %70, %72 : vector<1x256xf32>
    %74 = arith.addf %69, %73 : vector<1x256xf32>
    %75 = vector.extract_strided_slice %12 {offsets = [2, 0], sizes = [1, 256], strides = [1, 1]} : vector<4x256xf32> to vector<1x256xf32>
    %c2_26 = arith.constant 2 : index
    %c2_27 = arith.constant 2 : index
    %76 = memref.load %arg2[%c2_26, %c2_27] : memref<4x4xf32, #tpu.memory_space<smem>>
    %77 = vector.broadcast %76 : f32 to vector<1x256xf32>
    %78 = arith.mulf %75, %77 : vector<1x256xf32>
    %79 = arith.addf %74, %78 : vector<1x256xf32>
    %80 = vector.extract_strided_slice %12 {offsets = [3, 0], sizes = [1, 256], strides = [1, 1]} : vector<4x256xf32> to vector<1x256xf32>
    %c3_28 = arith.constant 3 : index
    %c2_29 = arith.constant 2 : index
    %81 = memref.load %arg2[%c3_28, %c2_29] : memref<4x4xf32, #tpu.memory_space<smem>>
    %82 = vector.broadcast %81 : f32 to vector<1x256xf32>
    %83 = arith.mulf %80, %82 : vector<1x256xf32>
    %84 = arith.addf %79, %83 : vector<1x256xf32>
    %85 = arith.index_cast %arg0 : i32 to index
    %c2_30 = arith.constant 2 : index
    %86 = memref.load %arg3[%85, %c2_30] : memref<2x4xf32, #tpu.memory_space<smem>>
    %87 = vector.broadcast %86 : f32 to vector<1x256xf32>
    %88 = arith.addf %84, %87 : vector<1x256xf32>
    %89 = vector.extract_strided_slice %7 {offsets = [2, 0], sizes = [1, 256], strides = [1, 1]} : vector<4x256xf32> to vector<1x256xf32>
    %90 = arith.subf %89, %88 : vector<1x256xf32>
    %91 = math.absf %90 : vector<1x256xf32>
    %92 = arith.addf %65, %91 : vector<1x256xf32>
    %93 = vector.extract_strided_slice %12 {offsets = [0, 0], sizes = [1, 256], strides = [1, 1]} : vector<4x256xf32> to vector<1x256xf32>
    %c0_31 = arith.constant 0 : index
    %c3_32 = arith.constant 3 : index
    %94 = memref.load %arg2[%c0_31, %c3_32] : memref<4x4xf32, #tpu.memory_space<smem>>
    %95 = vector.broadcast %94 : f32 to vector<1x256xf32>
    %96 = arith.mulf %93, %95 : vector<1x256xf32>
    %97 = vector.extract_strided_slice %12 {offsets = [1, 0], sizes = [1, 256], strides = [1, 1]} : vector<4x256xf32> to vector<1x256xf32>
    %c1_33 = arith.constant 1 : index
    %c3_34 = arith.constant 3 : index
    %98 = memref.load %arg2[%c1_33, %c3_34] : memref<4x4xf32, #tpu.memory_space<smem>>
    %99 = vector.broadcast %98 : f32 to vector<1x256xf32>
    %100 = arith.mulf %97, %99 : vector<1x256xf32>
    %101 = arith.addf %96, %100 : vector<1x256xf32>
    %102 = vector.extract_strided_slice %12 {offsets = [2, 0], sizes = [1, 256], strides = [1, 1]} : vector<4x256xf32> to vector<1x256xf32>
    %c2_35 = arith.constant 2 : index
    %c3_36 = arith.constant 3 : index
    %103 = memref.load %arg2[%c2_35, %c3_36] : memref<4x4xf32, #tpu.memory_space<smem>>
    %104 = vector.broadcast %103 : f32 to vector<1x256xf32>
    %105 = arith.mulf %102, %104 : vector<1x256xf32>
    %106 = arith.addf %101, %105 : vector<1x256xf32>
    %107 = vector.extract_strided_slice %12 {offsets = [3, 0], sizes = [1, 256], strides = [1, 1]} : vector<4x256xf32> to vector<1x256xf32>
    %c3_37 = arith.constant 3 : index
    %c3_38 = arith.constant 3 : index
    %108 = memref.load %arg2[%c3_37, %c3_38] : memref<4x4xf32, #tpu.memory_space<smem>>
    %109 = vector.broadcast %108 : f32 to vector<1x256xf32>
    %110 = arith.mulf %107, %109 : vector<1x256xf32>
    %111 = arith.addf %106, %110 : vector<1x256xf32>
    %112 = arith.index_cast %arg0 : i32 to index
    %c3_39 = arith.constant 3 : index
    %113 = memref.load %arg3[%112, %c3_39] : memref<2x4xf32, #tpu.memory_space<smem>>
    %114 = vector.broadcast %113 : f32 to vector<1x256xf32>
    %115 = arith.addf %111, %114 : vector<1x256xf32>
    %116 = vector.extract_strided_slice %7 {offsets = [3, 0], sizes = [1, 256], strides = [1, 1]} : vector<4x256xf32> to vector<1x256xf32>
    %117 = arith.subf %116, %115 : vector<1x256xf32>
    %118 = math.absf %117 : vector<1x256xf32>
    %119 = arith.addf %92, %118 : vector<1x256xf32>
    %120 = vector.shape_cast %119 : vector<1x256xf32> to vector<1x1x256xf32>
    %cst = arith.constant dense<0.000000e+00> : vector<1xf32>
    %121 = vector.multi_reduction <add>, %120, %cst [1, 2] : vector<1x1x256xf32> to vector<1xf32>
    %122 = vector.shape_cast %121 : vector<1xf32> to vector<1x1x1xf32>
    %123 = vector.extract %122[0, 0, 0] : f32 from vector<1x1x1xf32>
    %124 = vector.broadcast %123 : f32 to vector<1x1x1xf32>
    %c0_40 = arith.constant 0 : index
    %c0_41 = arith.constant 0 : index
    %c0_42 = arith.constant 0 : index
    %125 = vector.load %arg6[%c0_40, %c0_41, %c0_42] : memref<1x1x1xf32, #tpu.memory_space<vmem>>, vector<1x1x1xf32>
    tpu.vector_store %arg6[%c0_40, %c0_41, %c0_42], %124 {strides = array<i32>} : memref<1x1x1xf32, #tpu.memory_space<vmem>>, vector<1x1x1xf32>,
    return
  }
  func.func @transform_0(%arg0: i32) -> (i32, i32) {
    %c0_i32 = arith.constant 0 : i32
    %c0_i32_0 = arith.constant 0 : i32
    %c0_i32_1 = arith.constant 0 : i32
    return %c0_i32, %c0_i32_0 : i32, i32
  }
  func.func @transform_1(%arg0: i32) -> (i32, i32) {
    %c0_i32 = arith.constant 0 : i32
    %c0_i32_0 = arith.constant 0 : i32
    %c0_i32_1 = arith.constant 0 : i32
    return %c0_i32, %c0_i32_0 : i32, i32
  }
  func.func @transform_2(%arg0: i32) -> (i32, i32) {
    %c0_i32 = arith.constant 0 : i32
    %c0_i32_0 = arith.constant 0 : i32
    %c0_i32_1 = arith.constant 0 : i32
    return %c0_i32, %c0_i32_0 : i32, i32
  }
  func.func @transform_3(%arg0: i32) -> (i32, i32, i32) {
    %c0_i32 = arith.constant 0 : i32
    %c0_i32_0 = arith.constant 0 : i32
    %c0_i32_1 = arith.constant 0 : i32
    return %arg0, %c0_i32, %c0_i32_0 : i32, i32, i32
  }
  func.func @transform_4(%arg0: i32) -> (i32, i32, i32) {
    %c0_i32 = arith.constant 0 : i32
    %c0_i32_0 = arith.constant 0 : i32
    %c0_i32_1 = arith.constant 0 : i32
    return %arg0, %c0_i32, %c0_i32_0 : i32, i32, i32
  }
  func.func @transform_5(%arg0: i32) -> (i32, i32, i32) {
    %c0_i32 = arith.constant 0 : i32
    %c0_i32_0 = arith.constant 0 : i32
    %c0_i32_1 = arith.constant 0 : i32
    return %arg0, %c0_i32, %c0_i32_0 : i32, i32, i32
  }
}

</mosaic_0001>

<llo_original>
// kernel: tpu_custom_call.1
$region0: #{tpu_custom_call.1}
  #allocation0 [shape = 'u32[]', space=smem, size = 0x4, offset = 0x4, fixed_abs, tag = 'smem constant byte address 0x4 - core index']
  #allocation1 [shape = 'u32[72,128]{1,0:T(1,128)}', space=vmem, size = 0x9000, scoped, tag = 'internal scratch']
  %s0 = inlined_call_operand.hbm [shape: f32[2,2], index: 0, kind: input, shape index: {}]
  %s1 = inlined_call_operand.hbm [shape: f32[4,4], index: 1, kind: input, shape index: {}]
  %s2 = inlined_call_operand.hbm [shape: f32[2,4], index: 2, kind: input, shape index: {}]
  %s3 = inlined_call_operand.hbm [shape: f32[2,4,256], index: 3, kind: input, shape index: {}]
  %s4 = inlined_call_operand.hbm [shape: f32[2,4,256], index: 4, kind: input, shape index: {}]
  %s5 = inlined_call_operand.vmem [shape: f32[2,1,1], index: 5, kind: output, shape index: {}]
  %s6 = sld [smem:[#allocation0]]
  $region73: #{tpu_custom_call.1} parent=0
    _
  %s8 = ssub.s32 1, %s6
  %s9 = scalar_select 0, %s8, %s6
  $region1: #{tpu_custom_call.1} parent=0
    #allocation2 [shape = 'u8[1024]{0}', space=smem, size = 0x400, scoped, tag = 'input window, operand 0, single buffered']
    #allocation3 [shape = 's32[2]{0}', space=sflag, size = 0x8, scoped, tag = 'scoped memory for tpu_custom_call.1']
    #allocation4 [shape = 's32[2]{0}', space=sflag, size = 0x8, scoped, tag = 'scoped memory for tpu_custom_call.1']
    #allocation5 [shape = 'u8[2048]{0}', space=smem, size = 0x800, scoped, tag = 'input window, operand 1, single buffered']
    #allocation6 [shape = 's32[1]{0}', space=sflag, size = 0x4, scoped, tag = 'scoped memory for tpu_custom_call.1']
    #allocation7 [shape = 'u8[1024]{0}', space=smem, size = 0x400, scoped, tag = 'input window, operand 2, single buffered']
    #allocation8 [shape = 'u8[8192]{0}', space=vmem, size = 0x2000, scoped, tag = 'input window, operand 3']
    #allocation9 [shape = 'u8[8192]{0}', space=vmem, size = 0x2000, scoped, tag = 'input window, operand 4']
    #allocation10 [shape = 's32[2]{0}', space=sflag, size = 0x8, scoped, tag = 'scoped memory for tpu_custom_call.1']
    %10 = vsyncpa [#allocation4], 0
    %11 = vsyncpa [#allocation6], 0
    %12 = vsyncpa [#allocation3], 0
    %s13 = scalar_lea.sflag [#allocation3], 1
    %14 = vsyncpa %s13, 0
    %15 = vsyncpa [#allocation10], 0
    %s16 = scalar_lea.sflag [#allocation10], 1
    %17 = vsyncpa %s16, 0
    loop: start=0, step=1, limit=4
    $region2: #{tpu_custom_call.1} parent=1 // loop_pre_header
      _
    $region3: #{tpu_custom_call.1} parent=1 // loop_header
      %s19 = sphi 0, %s23
      %p20 = scmp.ge.s32.totalorder %s19, 4
      %s27 = sphi 0, %s27
      %s29 = sphi 0, %s27
      %s30 = sphi 0, %s29
      %s44 = sphi 0, %s30
      %s48 = sphi 0, %s48
      %s50 = sphi 0, %s48
      %s51 = sphi 0, %s50
      %s65 = sphi 0, %s51
      %s69 = sphi 0, %s69
      %s71 = sphi 0, %s69
      %s72 = sphi 0, %s71
      %s86 = sphi 0, %s72
      %s92 = sphi 0, %s94
      %s95 = sphi 0, %s92
      %s96 = sphi 0, %s95
      %s112 = sphi 0, %s96
      %s118 = sphi 0, %s120
      %s121 = sphi 0, %s118
      %s122 = sphi 0, %s121
      %s138 = sphi 0, %s122
      %s144 = sphi 0, %s146
      %s147 = sphi 0, %s144
      %s148 = sphi 0, %s147
      %s164 = sphi 0, %s148
    $region4: #{tpu_custom_call.1} parent=1 // loop_header_branch
      %22 = sbr.rel (%p20) target = $region8
    $region5: #{tpu_custom_call.1} parent=1 // loop_body
      %s24 = ssub.s32 %s19, 1
      %s25 = ssub.s32 %s19, 2
      %s26 = sadd.s32 %s19, 1
      %s28 = sadd.s32 %s27, 1
      %p31 = scmp.eq.s32.totalorder %s19, 1
      %p32 = scmp.ne.s32.totalorder %s27, %s29
      %p33 = scmp.eq.s32.totalorder %s19, 0
      %p34 = por %p32, %p33
      %p35 = scmp.ne.s32.totalorder %s27, %s29
      %p36 = scmp.eq.s32.totalorder %s24, 1
      %p37 = por %p35, %p36
      %p38 = scmp.ne.s32.totalorder %s29, %s30
      %p39 = scmp.eq.s32.totalorder %s24, 0
      %p40 = por %p38, %p39
      %p41 = scmp.ne.s32.totalorder %s29, %s30
      %p42 = scmp.eq.s32.totalorder %s25, 1
      %p43 = por %p41, %p42
      %p45 = scmp.ne.s32.totalorder %s30, %s44
      %p46 = scmp.eq.s32.totalorder %s25, 0
      %p47 = por %p45, %p46
      %s49 = sadd.s32 %s48, 1
      %p52 = scmp.eq.s32.totalorder %s19, 1
      %p53 = scmp.ne.s32.totalorder %s48, %s50
      %p54 = scmp.eq.s32.totalorder %s19, 0
      %p55 = por %p53, %p54
      %p56 = scmp.ne.s32.totalorder %s48, %s50
      %p57 = scmp.eq.s32.totalorder %s24, 1
      %p58 = por %p56, %p57
      %p59 = scmp.ne.s32.totalorder %s50, %s51
      %p60 = scmp.eq.s32.totalorder %s24, 0
      %p61 = por %p59, %p60
      %p62 = scmp.ne.s32.totalorder %s50, %s51
      %p63 = scmp.eq.s32.totalorder %s25, 1
      %p64 = por %p62, %p63
      %p66 = scmp.ne.s32.totalorder %s51, %s65
      %p67 = scmp.eq.s32.totalorder %s25, 0
      %p68 = por %p66, %p67
      %s70 = sadd.s32 %s69, 1
      %p73 = scmp.eq.s32.totalorder %s19, 1
      %p74 = scmp.ne.s32.totalorder %s69, %s71
      %p75 = scmp.eq.s32.totalorder %s19, 0
      %p76 = por %p74, %p75
      %p77 = scmp.ne.s32.totalorder %s69, %s71
      %p78 = scmp.eq.s32.totalorder %s24, 1
      %p79 = por %p77, %p78
      %p80 = scmp.ne.s32.totalorder %s71, %s72
      %p81 = scmp.eq.s32.totalorder %s24, 0
      %p82 = por %p80, %p81
      %p83 = scmp.ne.s32.totalorder %s71, %s72
      %p84 = scmp.eq.s32.totalorder %s25, 1
      %p85 = por %p83, %p84
      %p87 = scmp.ne.s32.totalorder %s72, %s86
      %p88 = scmp.eq.s32.totalorder %s25, 0
      %p89 = por %p87, %p88
      %s90 = ssub.s32 %s19, %s26
      %p91 = scmp.eq.s32.totalorder %s90, 0
      %s93 = sadd.s32 %s92, 1
      %s94 = scalar_select %p91, %s92, %s93
      %p97 = pneg %p91
      %p98 = scmp.eq.s32.totalorder %s19, 1
      %p99 = por %p97, %p98
      %p100 = scmp.ne.s32.totalorder %s92, %s95
      %p101 = scmp.eq.s32.totalorder %s19, 0
      %p102 = por %p100, %p101
      %p103 = scmp.ne.s32.totalorder %s92, %s95
      %p104 = scmp.eq.s32.totalorder %s24, 1
      %p105 = por %p103, %p104
      %p106 = scmp.ne.s32.totalorder %s95, %s96
      %p107 = scmp.eq.s32.totalorder %s24, 0
      %p108 = por %p106, %p107
      %p109 = scmp.ne.s32.totalorder %s95, %s96
      %p110 = scmp.eq.s32.totalorder %s25, 1
      %p111 = por %p109, %p110
      %p113 = scmp.ne.s32.totalorder %s96, %s112
      %p114 = scmp.eq.s32.totalorder %s25, 0
      %p115 = por %p113, %p114
      %s116 = ssub.s32 %s19, %s26
      %p117 = scmp.eq.s32.totalorder %s116, 0
      %s119 = sadd.s32 %s118, 1
      %s120 = scalar_select %p117, %s118, %s119
      %p123 = pneg %p117
      %p124 = scmp.eq.s32.totalorder %s19, 1
      %p125 = por %p123, %p124
      %p126 = scmp.ne.s32.totalorder %s118, %s121
      %p127 = scmp.eq.s32.totalorder %s19, 0
      %p128 = por %p126, %p127
      %p129 = scmp.ne.s32.totalorder %s118, %s121
      %p130 = scmp.eq.s32.totalorder %s24, 1
      %p131 = por %p129, %p130
      %p132 = scmp.ne.s32.totalorder %s121, %s122
      %p133 = scmp.eq.s32.totalorder %s24, 0
      %p134 = por %p132, %p133
      %p135 = scmp.ne.s32.totalorder %s121, %s122
      %p136 = scmp.eq.s32.totalorder %s25, 1
      %p137 = por %p135, %p136
      %p139 = scmp.ne.s32.totalorder %s122, %s138
      %p140 = scmp.eq.s32.totalorder %s25, 0
      %p141 = por %p139, %p140
      %s142 = ssub.s32 %s19, %s26
      %p143 = scmp.eq.s32.totalorder %s142, 0
      %s145 = sadd.s32 %s144, 1
      %s146 = scalar_select %p143, %s144, %s145
      %p149 = pneg %p143
      %p150 = scmp.eq.s32.totalorder %s19, 1
      %p151 = por %p149, %p150
      %p152 = scmp.ne.s32.totalorder %s144, %s147
      %p153 = scmp.eq.s32.totalorder %s19, 0
      %p154 = por %p152, %p153
      %p155 = scmp.ne.s32.totalorder %s144, %s147
      %p156 = scmp.eq.s32.totalorder %s24, 1
      %p157 = por %p155, %p156
      %p158 = scmp.ne.s32.totalorder %s147, %s148
      %p159 = scmp.eq.s32.totalorder %s24, 0
      %p160 = por %p158, %p159
      %p161 = scmp.ne.s32.totalorder %s147, %s148
      %p162 = scmp.eq.s32.totalorder %s25, 1
      %p163 = por %p161, %p162
      %p165 = scmp.ne.s32.totalorder %s148, %s164
      %p166 = scmp.eq.s32.totalorder %s25, 0
      %p167 = por %p165, %p166
      %p168 = scmp.le.s32.totalorder 1, %s19
      %p169 = scmp.lt.s32.totalorder %s19, 3
      %p170 = pnand %p168, %p169
      %p171 = pneg %p170
      // Predicated region
      $region9: #{tpu_custom_call.1} parent=5 // pred_check
        _
      $region10: #{tpu_custom_call.1} parent=5 // pred_check_branch
        %173 = sbr.rel (%p170) target = $region12
      $region11: #{tpu_custom_call.1} parent=5 // pred_region
        %s174 = ssub.s32 %s19, 1
        // Predicated region
        $region13: #{tpu_custom_call.1} parent=11 // pred_check
          %p175 = pneg %p40
        $region14: #{tpu_custom_call.1} parent=11 // pred_check_branch
          %177 = sbr.rel (%p175) target = $region16
        $region15: #{tpu_custom_call.1} parent=11 // pred_region
          %179 = vsyncadd [#allocation4], 0
          %s181 = sshll.u32 %s0, 4
          %s182 = int_to_ptr.hbm [resolvable:$true] %s181
          %184 = dma.hbm_to_smem %s182, 32, [#allocation2], [#allocation4]
        $region16: #{tpu_custom_call.1} parent=11 // pred_fallthru
          _
        // Predicated region
        $region17: #{tpu_custom_call.1} parent=11 // pred_check
          %p185 = pneg %p61
        $region18: #{tpu_custom_call.1} parent=11 // pred_check_branch
          %187 = sbr.rel (%p185) target = $region20
        $region19: #{tpu_custom_call.1} parent=11 // pred_region
          %189 = vsyncadd [#allocation6], 0
          %s191 = sshll.u32 %s1, 4
          %s192 = int_to_ptr.hbm [resolvable:$true] %s191
          %194 = dma.hbm_to_smem %s192, 64, [#allocation5], [#allocation6]
        $region20: #{tpu_custom_call.1} parent=11 // pred_fallthru
          _
        // Predicated region
        $region21: #{tpu_custom_call.1} parent=11 // pred_check
          %p195 = pneg %p82
        $region22: #{tpu_custom_call.1} parent=11 // pred_check_branch
          %197 = sbr.rel (%p195) target = $region24
        $region23: #{tpu_custom_call.1} parent=11 // pred_region
          %199 = vsyncadd [#allocation6], 0
          %s201 = sshll.u32 %s2, 4
          %s202 = int_to_ptr.hbm [resolvable:$true] %s201
          %204 = dma.hbm_to_smem %s202, 32, [#allocation7], [#allocation6]
        $region24: #{tpu_custom_call.1} parent=11 // pred_fallthru
          _
      $region12: #{tpu_custom_call.1} parent=5 // pred_fallthru
        _
      %p205 = scmp.lt.s32.totalorder %s19, 2
      // Predicated region
      $region25: #{tpu_custom_call.1} parent=5 // pred_check
        %p206 = pneg %p205
      $region26: #{tpu_custom_call.1} parent=5 // pred_check_branch
        %208 = sbr.rel (%p206) target = $region28
      $region27: #{tpu_custom_call.1} parent=5 // pred_region
        // Predicated region
        $region29: #{tpu_custom_call.1} parent=27 // pred_check
          %p209 = pneg %p102
        $region30: #{tpu_custom_call.1} parent=27 // pred_check_branch
          %211 = sbr.rel (%p209) target = $region32
        $region31: #{tpu_custom_call.1} parent=27 // pred_region
          %s212 = sand.u32 %s92, 1
          %s213 = scalar_lea.sflag [#allocation3], %s212
          %s214 = sand.u32 %s92, 1
          %s215 = smul.addr %s214, 8
          %s216 = scalar_lea.vmem [#allocation8], %s215
          %218 = vsyncadd %s213, 0
          %s219 = smul.addr %s19, 2
          %s220 = smul.addr %s219, 4
          %s221 = scalar_lea.hbm %s3, %s220
          %s223 = sshll.u32 %s221, 4
          %s224 = int_to_ptr.hbm [resolvable:$true] %s223
          %s225 = sshll.u32 %s216, 4
          %s226 = int_to_ptr.vmem [resolvable:$true] %s225
          %228 = dma.hbm_to_vmem [thread:$0]  %s224, 128, %s226, %s213
        $region32: #{tpu_custom_call.1} parent=27 // pred_fallthru
          _
        // Predicated region
        $region33: #{tpu_custom_call.1} parent=27 // pred_check
          %p229 = pneg %p128
        $region34: #{tpu_custom_call.1} parent=27 // pred_check_branch
          %231 = sbr.rel (%p229) target = $region36
        $region35: #{tpu_custom_call.1} parent=27 // pred_region
          %s232 = sand.u32 %s118, 1
          %s233 = scalar_lea.sflag [#allocation10], %s232
          %s234 = sand.u32 %s118, 1
          %s235 = smul.addr %s234, 8
          %s236 = scalar_lea.vmem [#allocation9], %s235
          %238 = vsyncadd %s233, 0
          %s239 = smul.addr %s19, 2
          %s240 = smul.addr %s239, 4
          %s241 = scalar_lea.hbm %s4, %s240
          %s243 = sshll.u32 %s241, 4
          %s244 = int_to_ptr.hbm [resolvable:$true] %s243
          %s245 = sshll.u32 %s236, 4
          %s246 = int_to_ptr.vmem [resolvable:$true] %s245
          %248 = dma.hbm_to_vmem [thread:$0]  %s244, 128, %s246, %s233
        $region36: #{tpu_custom_call.1} parent=27 // pred_fallthru
          _
      $region28: #{tpu_custom_call.1} parent=5 // pred_fallthru
        _
      %p249 = scmp.le.s32.totalorder 1, %s19
      %p250 = scmp.lt.s32.totalorder %s19, 3
      %p251 = pnand %p249, %p250
      %p252 = pneg %p251
      // Predicated region
      $region37: #{tpu_custom_call.1} parent=5 // pred_check
        _
      $region38: #{tpu_custom_call.1} parent=5 // pred_check_branch
        %254 = sbr.rel (%p251) target = $region40
      $region39: #{tpu_custom_call.1} parent=5 // pred_region
        %s255 = ssub.s32 %s19, 1
        // Predicated region
        $region41: #{tpu_custom_call.1} parent=39 // pred_check
          %p256 = pneg %p40
        $region42: #{tpu_custom_call.1} parent=39 // pred_check_branch
          %258 = sbr.rel (%p256) target = $region44
        $region43: #{tpu_custom_call.1} parent=39 // pred_region
          %260 = dma.done [#allocation4], 32
        $region44: #{tpu_custom_call.1} parent=39 // pred_fallthru
          _
        // Predicated region
        $region45: #{tpu_custom_call.1} parent=39 // pred_check
          %p261 = pneg %p61
        $region46: #{tpu_custom_call.1} parent=39 // pred_check_branch
          %263 = sbr.rel (%p261) target = $region48
        $region47: #{tpu_custom_call.1} parent=39 // pred_region
          %265 = dma.done [#allocation6], 64
        $region48: #{tpu_custom_call.1} parent=39 // pred_fallthru
          _
        // Predicated region
        $region49: #{tpu_custom_call.1} parent=39 // pred_check
          %p266 = pneg %p82
        $region50: #{tpu_custom_call.1} parent=39 // pred_check_branch
          %268 = sbr.rel (%p266) target = $region52
        $region51: #{tpu_custom_call.1} parent=39 // pred_region
          %270 = dma.done [#allocation6], 32
        $region52: #{tpu_custom_call.1} parent=39 // pred_fallthru
          _
        %s271 = sand.u32 %s95, 1
        %s272 = scalar_lea.sflag [#allocation3], %s271
        %s273 = sand.u32 %s95, 1
        %s274 = smul.addr %s273, 8
        %s275 = scalar_lea.vmem [#allocation8], %s274
        // Predicated region
        $region53: #{tpu_custom_call.1} parent=39 // pred_check
          %p276 = pneg %p108
        $region54: #{tpu_custom_call.1} parent=39 // pred_check_branch
          %278 = sbr.rel (%p276) target = $region56
        $region55: #{tpu_custom_call.1} parent=39 // pred_region
          %280 = dma.done %s272, 128
        $region56: #{tpu_custom_call.1} parent=39 // pred_fallthru
          _
        %s281 = sand.u32 %s121, 1
        %s282 = scalar_lea.sflag [#allocation10], %s281
        %s283 = sand.u32 %s121, 1
        %s284 = smul.addr %s283, 8
        %s285 = scalar_lea.vmem [#allocation9], %s284
        // Predicated region
        $region57: #{tpu_custom_call.1} parent=39 // pred_check
          %p286 = pneg %p134
        $region58: #{tpu_custom_call.1} parent=39 // pred_check_branch
          %288 = sbr.rel (%p286) target = $region60
        $region59: #{tpu_custom_call.1} parent=39 // pred_region
          %290 = dma.done %s282, 128
        $region60: #{tpu_custom_call.1} parent=39 // pred_fallthru
          _
        %291 = sfence
        %p292 = pneg %p40
        %p293 = pneg %p37
        %p294 = pneg %p61
        %p295 = pneg %p58
        %p296 = pneg %p82
        %p297 = pneg %p79
        %s298 = sand.u32 %s95, 1
        %s299 = scalar_lea.sflag [#allocation3], %s298
        %s300 = sand.u32 %s95, 1
        %s301 = smul.addr %s300, 8
        %s302 = scalar_lea.vmem [#allocation8], %s301
        %p303 = pneg %p108
        %p304 = pneg %p105
        %s305 = sand.u32 %s121, 1
        %s306 = scalar_lea.sflag [#allocation10], %s305
        %s307 = sand.u32 %s121, 1
        %s308 = smul.addr %s307, 8
        %s309 = scalar_lea.vmem [#allocation9], %s308
        %p310 = pneg %p134
        %p311 = pneg %p131
        %p312 = pneg %p160
        %p313 = pneg %p157
        %p314 = scmp.lt.s32.totalorder %s24, 1
        %s315 = scalar_select %p314, %s24, 1
        %s316 = scalar_lea.vmem %s5, %s315
        %p317 = scmp.lt.s32.totalorder %s24, 1
        %s318 = scalar_select %p317, %s24, 1
        %s319 = scalar_lea.vmem %s5, %s318
        %s320 = smul.u32 %s24, 128
        %s321 = sld [smem:[#allocation2 + %s320]]
        %s322 = sadd.s32 %s320, 1
        %s323 = sld [smem:[#allocation2 + %s322]]
        %v324 = vld [vmem:[%s275] sm:$0xff]
        %v325 = vld [vmem:[%s285] sm:$0xff]
        %v326 = vstv %s321
        %v327 = vmul.f32 %v326, %v324
        %v328 = vstv %s323
        %v329 = vmul.f32 %v328, %v325
        %v330 = vadd.f32 %v327, %v329
        %s331 = sld [smem:[#allocation5]]
        %v332 = vstv %s331
        %v333 = vmul.f32 %v330, %v332
        %s334 = sld [smem:[#allocation5 + $0x80]]
        %v335 = vstv %s334
        %v336 = vmul.f32 %v330, %v335
        %v338 = vrot.slane %v336, 5
        %v339 = vrot.slane %v338, 4
        %v341 = vadd.f32 %v333, %v339
        %s342 = sld [smem:[#allocation5 + $0x100]]
        %v343 = vstv %s342
        %v344 = vmul.f32 %v330, %v343
        %v346 = vrot.slane %v344, 6
        %v347 = vrot.slane %v346, 4
        %v349 = vadd.f32 %v341, %v347
        %s350 = sld [smem:[#allocation5 + $0x180]]
        %v351 = vstv %s350
        %v352 = vmul.f32 %v330, %v351
        %v354 = vrot.slane %v352, 7
        %v355 = vrot.slane %v354, 4
        %v357 = vadd.f32 %v349, %v355
        %s358 = sld [smem:[#allocation7 + %s320]]
        %v359 = vstv %s358
        %v360 = vadd.f32 %v357, %v359
        %v361 = vsub.f32 %v325, %v360
        %v362 = vand.u32 2147483647, %v361
        %s363 = sld [smem:[#allocation5 + $0x1]]
        %v364 = vstv %s363
        %v365 = vmul.f32 %v330, %v364
        %s366 = sld [smem:[#allocation5 + $0x81]]
        %v367 = vstv %s366
        %v368 = vmul.f32 %v330, %v367
        %v370 = vrot.slane %v368, 5
        %v371 = vrot.slane %v370, 4
        %v373 = vadd.f32 %v365, %v371
        %s374 = sld [smem:[#allocation5 + $0x101]]
        %v375 = vstv %s374
        %v376 = vmul.f32 %v330, %v375
        %v378 = vrot.slane %v376, 6
        %v379 = vrot.slane %v378, 4
        %v381 = vadd.f32 %v373, %v379
        %s382 = sld [smem:[#allocation5 + $0x181]]
        %v383 = vstv %s382
        %v384 = vmul.f32 %v330, %v383
        %v386 = vrot.slane %v384, 7
        %v387 = vrot.slane %v386, 4
        %v389 = vadd.f32 %v381, %v387
        %s390 = sld [smem:[#allocation7 + %s322]]
        %v391 = vstv %s390
        %v392 = vadd.f32 %v389, %v391
        %v394 = vrot.slane %v392, 7
        %v396 = vsub.f32 %v325, %v394
        %v397 = vand.u32 2147483647, %v396
        %v399 = vrot.slane %v397, 5
        %v400 = vrot.slane %v399, 4
        %v402 = vadd.f32 %v362, %v400
        %s403 = sld [smem:[#allocation5 + $0x2]]
        %v404 = vstv %s403
        %v405 = vmul.f32 %v330, %v404
        %s406 = sld [smem:[#allocation5 + $0x82]]
        %v407 = vstv %s406
        %v408 = vmul.f32 %v330, %v407
        %v410 = vrot.slane %v408, 5
        %v411 = vrot.slane %v410, 4
        %v413 = vadd.f32 %v405, %v411
        %s414 = sld [smem:[#allocation5 + $0x102]]
        %v415 = vstv %s414
        %v416 = vmul.f32 %v330, %v415
        %v418 = vrot.slane %v416, 6
        %v419 = vrot.slane %v418, 4
        %v421 = vadd.f32 %v413, %v419
        %s422 = sld [smem:[#allocation5 + $0x182]]
        %v423 = vstv %s422
        %v424 = vmul.f32 %v330, %v423
        %v426 = vrot.slane %v424, 7
        %v427 = vrot.slane %v426, 4
        %v429 = vadd.f32 %v421, %v427
        %s430 = sadd.s32 %s320, 2
        %s431 = sld [smem:[#allocation7 + %s430]]
        %v432 = vstv %s431
        %v433 = vadd.f32 %v429, %v432
        %v435 = vrot.slane %v433, 6
        %v437 = vsub.f32 %v325, %v435
        %v438 = vand.u32 2147483647, %v437
        %v440 = vrot.slane %v438, 6
        %v441 = vrot.slane %v440, 4
        %v443 = vadd.f32 %v402, %v441
        %s444 = sld [smem:[#allocation5 + $0x3]]
        %v445 = vstv %s444
        %v446 = vmul.f32 %v330, %v445
        %s447 = sld [smem:[#allocation5 + $0x83]]
        %v448 = vstv %s447
        %v449 = vmul.f32 %v330, %v448
        %v451 = vrot.slane %v449, 5
        %v452 = vrot.slane %v451, 4
        %v454 = vadd.f32 %v446, %v452
        %s455 = sld [smem:[#allocation5 + $0x103]]
        %v456 = vstv %s455
        %v457 = vmul.f32 %v330, %v456
        %v459 = vrot.slane %v457, 6
        %v460 = vrot.slane %v459, 4
        %v462 = vadd.f32 %v454, %v460
        %s463 = sld [smem:[#allocation5 + $0x183]]
        %v464 = vstv %s463
        %v465 = vmul.f32 %v330, %v464
        %v467 = vrot.slane %v465, 7
        %v468 = vrot.slane %v467, 4
        %v470 = vadd.f32 %v462, %v468
        %s471 = sadd.s32 %s320, 3
        %s472 = sld [smem:[#allocation7 + %s471]]
        %v473 = vstv %s472
        %v474 = vadd.f32 %v470, %v473
        %v476 = vrot.slane %v474, 5
        %v478 = vsub.f32 %v325, %v476
        %v479 = vand.u32 2147483647, %v478
        %v481 = vrot.slane %v479, 7
        %v482 = vrot.slane %v481, 4
        %v484 = vadd.f32 %v443, %v482
        %v486 = vperm.slane %v484, 0
        %v487 = vperm.slane %v484, 4
        %vm490 = vcmask 1040384
        %v491 = vsel %vm490, %v486, 0.0
        %v492 = vsel %vm490, %v487, 0.0
        %v493 = vadd.f32 %v491, %v492
        %494 = vadd.xlane.f32.xlu0 %v493
        %v495 = vpop.xlane.xlu0 %494
        %v496 = vrot.slane %v495, 4
        %v497 = vadd.f32 %v495, %v496
        %v498 = vrot.slane %v497, 2
        %v499 = vadd.f32 %v497, %v498
        %v500 = vrot.slane %v499, 1
        %v501 = vadd.f32 %v499, %v500
        %s502 = vtos %v501
        %v503 = vstv %s502
        %vm504 = vcmask 0
        %505 = vst.msk [vmem:[%s319] sm:$0x1] %vm504, %v503
        %p506 = scmp.lt.s32.totalorder %s24, 1
        %s507 = scalar_select %p506, %s24, 1
        %s508 = scalar_lea.vmem %s5, %s507
        // Predicated region
        $region61: #{tpu_custom_call.1} parent=39 // pred_check
          %p509 = pneg %p157
        $region62: #{tpu_custom_call.1} parent=39 // pred_check_branch
          %511 = sbr.rel (%p509) target = $region64
        $region63: #{tpu_custom_call.1} parent=39 // pred_region
          _
        $region64: #{tpu_custom_call.1} parent=39 // pred_fallthru
          _
      $region40: #{tpu_custom_call.1} parent=5 // pred_fallthru
        _
      %p512 = scmp.le.s32.totalorder 2, %s19
      // Predicated region
      $region65: #{tpu_custom_call.1} parent=5 // pred_check
        %p513 = pneg %p512
      $region66: #{tpu_custom_call.1} parent=5 // pred_check_branch
        %515 = sbr.rel (%p513) target = $region68
      $region67: #{tpu_custom_call.1} parent=5 // pred_region
        %s516 = ssub.s32 %s19, 2
        // Predicated region
        $region69: #{tpu_custom_call.1} parent=67 // pred_check
          %p517 = pneg %p163
        $region70: #{tpu_custom_call.1} parent=67 // pred_check_branch
          %519 = sbr.rel (%p517) target = $region72
        $region71: #{tpu_custom_call.1} parent=67 // pred_region
          %p520 = scmp.lt.s32.totalorder %s25, 1
          %s521 = scalar_select %p520, %s25, 1
          %s522 = scalar_lea.vmem %s5, %s521
        $region72: #{tpu_custom_call.1} parent=67 // pred_fallthru
          _
      $region68: #{tpu_custom_call.1} parent=5 // pred_fallthru
        _
    $region6: #{tpu_custom_call.1} parent=1 // loop_footer
      %s23 = sadd.s32 1, %s19
    $region7: #{tpu_custom_call.1} parent=1 // loop_footer_branch
      %18 = sbr.rel target = $region3
    $region8: #{tpu_custom_call.1} parent=1 // loop_exit
      _
    %523 = vsyncpa [#allocation3], 1
    %s524 = scalar_lea.sflag [#allocation3], 1
    %525 = vsyncpa %s524, 1
    %526 = vsyncpa [#allocation10], 1
    %s527 = scalar_lea.sflag [#allocation10], 1
    %528 = vsyncpa %s527, 1
    %529 = vsyncpa [#allocation4], 1
    %s530 = scalar_lea.sflag [#allocation4], 1
    %531 = vsyncpa %s530, 1
    %532 = vsyncpa [#allocation6], 1

</llo_original>
